<compile_context>
chip_gen: v7x
topology: tpu7x:2x2x1
jax: 0.10.0
libtpu: 0.0.40
codegen_flags: <defaults>
</compile_context>

<pallas_src>
import functools

import jax
import jax.numpy as jnp
from jax import lax
from jax.experimental import pallas as pl
from jax.experimental.pallas import tpu as pltpu


# Fused (whole-array) path only when 4 padded f32 arrays fit in this budget; full-size
# temporaries (d) add ~25-50% on top, still far below the 16 MiB v5e scoped default.
_FUSED_RESIDENT_LIMIT = 4 << 20
# Per-input row-tile target for the tiled two-pass path (BlockSpec double-buffers).
_ROW_TILE_TARGET_BYTES = 1 << 20


def _choose_layout(L, max_rows=256):
    """(R, C) with R*C == L: lane-dense rows (C % 128 == 0) and as many rows per batch
    as possible (R % 8 == 0) so sublanes are occupied and the row axis is tileable."""
    divs = [r for r in range(1, min(L, max_rows) + 1) if L % r == 0]
    both = [r for r in divs if r % 8 == 0 and (L // r) % 128 == 0]
    if both:
        return both[-1], L // both[-1]
    lane_ok = [r for r in divs if (L // r) % 128 == 0]
    if lane_ok:
        return lane_ok[-1], L // lane_ok[-1]
    sub_ok = [r for r in divs if r % 8 == 0]
    if sub_ok:
        return sub_ok[0], L // sub_ok[0]
    return 1, L


def _choose_row_tile(R, C, target_bytes):
    """Rows per grid step: a multiple of 8 (layout rule) that divides R, sized so one
    f32 input tile is ~target_bytes; falls back to full R (always layout-legal)."""
    cap = max(1, target_bytes // (4 * C))
    if R <= cap:
        return R
    cand = [t for t in range(8, cap + 1, 8) if R % t == 0]
    return cand[-1] if cand else R


# ---------------------------------------------------------------------------
# Kernels
# ---------------------------------------------------------------------------

def _bp2_fused_adv_kernel(params_ref, p_ref, o_ref, g_ref, out_ref):
    """Single-pass adversarial update for inputs that fit in VMEM.

    params_ref: SMEM f32[3] = [alpha_step, grad_step, w_l2]
    p/o/g/out : VMEM f32[B, R, C]  (R*C == N*3, flat per-batch layout)
    """
    p = p_ref[...]
    o = o_ref[...]
    g = g_ref[...]
    alpha_step = params_ref[0]
    w_l2 = params_ref[2]

    # loss_cal: grad of the L2 term is proportional to (p - o); the constant factor
    # cancels under the per-batch Frobenius normalization.  Faithful to torch: no eps
    # guard, points == ori gives inf/nan.
    d = p - o
    dd = jnp.sum(jnp.sum(d * d, axis=2, keepdims=True), axis=1, keepdims=True)  # (B,1,1)
    dg = jnp.sum(jnp.sum(d * g, axis=2, keepdims=True), axis=1, keepdims=True)
    gg = jnp.sum(jnp.sum(g * g, axis=2, keepdims=True), axis=1, keepdims=True)

    inv_nd = w_l2 / jnp.sqrt(dd)          # deltas = inv_nd * d
    num = inv_nd * dg                     # <deltas, g> per batch
    beta = num / gg                       # proj_surface coefficient
    # Analytic global norm: ||alpha||^2 = sum_b (||deltas_b||^2 - num_b^2 / gg_b)
    #                                   = sum_b (w_l2^2 - num_b^2 / gg_b).
    alpha_sq = jnp.sum(w_l2 * w_l2 - num * num / gg, axis=0, keepdims=True)      # (1,1,1)
    scale = alpha_step / jnp.sqrt(alpha_sq)
    # z = p - alpha_step * alpha_hat,  alpha = deltas - beta * g
    out_ref[...] = p - scale * (inv_nd * d - beta * g)


def _bp2_reduce_kernel(p_ref, o_ref, g_ref, dd_ref, dg_ref, gg_ref):
    """Tiled pass 1: per-batch partial sums accumulated over the row-tile axis."""
    @pl.when(pl.program_id(1) == 0)
    def _init():
        dd_ref[...] = jnp.zeros_like(dd_ref)
        dg_ref[...] = jnp.zeros_like(dg_ref)
        gg_ref[...] = jnp.zeros_like(gg_ref)

    p = p_ref[...]            # (1, TR, C)
    o = o_ref[...]
    g = g_ref[...]
    d = p - o
    dd_ref[...] += jnp.sum(jnp.sum(d * d, axis=2, keepdims=True), axis=1, keepdims=True)
    dg_ref[...] += jnp.sum(jnp.sum(d * g, axis=2, keepdims=True), axis=1, keepdims=True)
    gg_ref[...] += jnp.sum(jnp.sum(g * g, axis=2, keepdims=True), axis=1, keepdims=True)


def _bp2_apply_kernel(coef_ref, p_ref, o_ref, g_ref, out_ref):
    """Tiled pass 2: out = p + cd_b*(p - o) + cg_b*g, per-batch coefficients in SMEM."""
    b = pl.program_id(0)
    cd = coef_ref[b, 0]
    cg = coef_ref[b, 1]
    p = p_ref[...]
    out_ref[...] = p + cd * (p - o_ref[...]) + cg * g_ref[...]


def _bp2_grad_kernel(step_ref, p_ref, g_ref, out_ref):
    """Not-yet-adversarial branch: out = p - grad_step * g (ori_points never DMA'd)."""
    out_ref[...] = p_ref[...] - step_ref[0, 0] * g_ref[...]


# ---------------------------------------------------------------------------
# Forward wrapper
# ---------------------------------------------------------------------------

@functools.partial(jax.jit, static_argnames=("row_tile_bytes", "force_tiled"))
def _bp2_forward(points, ori_points, g_hat, logits, target, params,
                 *, row_tile_bytes=_ROW_TILE_TARGET_BYTES, force_tiled=False):
    """Single-dispatch forward: XLA argmax + branch-specialized Pallas kernels."""
    B, N, _ = points.shape
    L = N * 3
    R, C = _choose_layout(L)
    TR = _choose_row_tile(R, C, row_tile_bytes)
    n_rt = R // TR

    p3 = points.reshape(B, R, C).astype(jnp.float32)
    o3 = ori_points.reshape(B, R, C).astype(jnp.float32)
    g3 = g_hat.reshape(B, R, C).astype(jnp.float32)

    # Branch decision (torch: logits.argmax(1).item() != target.item()), on device.
    pred0 = jnp.argmax(logits[0]).astype(jnp.int32)
    tgt0 = target.reshape(-1)[0].astype(jnp.int32)
    is_adv = pred0 != tgt0

    alpha_step = params[0]
    grad_step = params[1]
    w_l2 = params[2]

    # Padded (8,128)-layout footprint of the 4 resident f32 arrays in the fused path.
    padded_bytes = B * (-(-R // 8) * 8) * (-(-C // 128) * 128) * 4
    use_fused = (not force_tiled) and (4 * padded_bytes <= _FUSED_RESIDENT_LIMIT)

    tile_spec = pl.BlockSpec((1, TR, C), lambda b, r: (b, r, 0))
    sum_spec = pl.BlockSpec((1, 1, 1), lambda b, r: (b, 0, 0))
    smem_spec = pl.BlockSpec(memory_space=pltpu.MemorySpace.SMEM)
    vmem_spec = pl.BlockSpec(memory_space=pltpu.MemorySpace.VMEM)

    def adv_fused():
        return pl.pallas_call(
            _bp2_fused_adv_kernel,
            out_shape=jax.ShapeDtypeStruct((B, R, C), jnp.float32),
            in_specs=[smem_spec, vmem_spec, vmem_spec, vmem_spec],
            out_specs=vmem_spec,
        )(params, p3, o3, g3)

    def adv_tiled():
        dd, dg, gg = pl.pallas_call(
            _bp2_reduce_kernel,
            grid=(B, n_rt),
            out_shape=(jax.ShapeDtypeStruct((B, 1, 1), jnp.float32),) * 3,
            in_specs=[tile_spec, tile_spec, tile_spec],
            out_specs=(sum_spec, sum_spec, sum_spec),
            compiler_params=pltpu.CompilerParams(
                dimension_semantics=("parallel", "arbitrary")),
        )(p3, o3, g3)
        # Tiny per-batch scalar math in XLA (exact sqrt/div), including the analytic
        # global ||alpha||: only two per-batch coefficients reach pass 2.
        inv_nd = w_l2 / jnp.sqrt(dd)                  # (B,1,1)
        num = inv_nd * dg
        beta = num / gg
        alpha_sq = jnp.sum(w_l2 * w_l2 - num * num / gg)
        s = alpha_step / jnp.sqrt(alpha_sq)
        cd = -s * inv_nd
        cg = s * beta
        coef = jnp.concatenate([cd, cg], axis=2).reshape(B, 2)
        return pl.pallas_call(
            _bp2_apply_kernel,
            grid=(B, n_rt),
            out_shape=jax.ShapeDtypeStruct((B, R, C), jnp.float32),
            in_specs=[smem_spec, tile_spec, tile_spec, tile_spec],
            out_specs=tile_spec,
            compiler_params=pltpu.CompilerParams(
                dimension_semantics=("parallel", "parallel")),
        )(coef, p3, o3, g3)

    def grad_branch():
        step = grad_step.reshape(1, 1)
        return pl.pallas_call(
            _bp2_grad_kernel,
            grid=(B, n_rt),
            out_shape=jax.ShapeDtypeStruct((B, R, C), jnp.float32),
            in_specs=[smem_spec, tile_spec, tile_spec],
            out_specs=tile_spec,
            compiler_params=pltpu.CompilerParams(
                dimension_semantics=("parallel", "parallel")),
        )(step, p3, g3)

    adv_branch = adv_fused if use_fused else adv_tiled
    out3 = lax.cond(is_adv, adv_branch, grad_branch)
    return out3.reshape(B, N, 3), is_adv


class BoundaryProjection2:
    """JAX/Pallas port of boundary_projection_2 (forward pass)."""

    def __init__(self, l2_weight=1.0, hd_weight=0.0, cd_weight=0.0,
                 curv_weight=1.0, curv_loss_knn=16, step_size=0.05,
                 stage2_steps=0.02, max_steps=50, exponential_step=True,
                 weights=(0.5, 0.5), optim_seq=('l2', 'curv')):
        self.l2_weight = l2_weight
        self.hd_weight = hd_weight
        self.cd_weight = cd_weight
        self.curv_weight = curv_weight
        self.curv_loss_knn = curv_loss_knn
        self.step_size = step_size
        self.stage2_step_size = stage2_steps
        self.max_steps = max_steps
        self.exponential_step = exponential_step
        self.weights = list(weights)
        self.optim_seq = list(optim_seq)
        self.gamma = 0.09
        self.initial_lr = 0.03
        self.in_out = False
        self.init()

    def init(self):
        self.learning_rate = self.initial_lr
        self.grad_lr = self.initial_lr
        self.epoch = 0
        self.output_losses = jnp.ones((len(self.optim_seq),), jnp.float32) * 1e5
        self.output_points = None

    def update_step_size(self):
        self.learning_rate = self.learning_rate * (1 - self.gamma)
        self.grad_lr = self.grad_lr * (1 - self.gamma)

    def forward(self, points, ori_points, normal_vec, g_hat, logits, target):
        # normal_vec only feeds the curvature loss.
        # TODO(synk): the 'curv' term of loss_cal (autograd of local_curvature_loss) is
        # not defined in the provided source; its contribution to `deltas` and the
        # output_losses / output_points bookkeeping (which needs the loss values) are
        # omitted here.
        del normal_vec

        if self.exponential_step:
            alpha_step, grad_step = self.learning_rate, self.grad_lr
        else:
            alpha_step, grad_step = self.stage2_step_size, self.step_size

        params = jnp.array([alpha_step, grad_step, self.weights[0]], jnp.float32)
        new_points, is_adv = _bp2_forward(
            points, ori_points, g_hat, logits, target, params)

        # Lazy device scalar (no per-call host sync); use bool(self.in_out) if needed.
        self.in_out = is_adv
        self.epoch += 1
        self.update_step_size()
        return new_points


def _ref_forward(points, ori, g, logits, target, w_l2, alpha_step, grad_step):
    """Pure-JAX reference of the same forward semantics."""
    d = 2.0 * (points - ori)
    n = jnp.sqrt(jnp.sum(d * d, axis=(1, 2), keepdims=True))
    deltas = w_l2 * d / n
    beta = (jnp.sum(deltas * g, axis=(1, 2), keepdims=True)
            / jnp.sum(g * g, axis=(1, 2), keepdims=True))
    alpha = deltas - beta * g
    alpha_hat = alpha / jnp.sqrt(jnp.sum(alpha * alpha))
    is_adv = jnp.argmax(logits[0]) != target[0]
    return jnp.where(is_adv, points - alpha_hat * alpha_step,
                     points - g * grad_step)


if __name__ == "__main__":
    key = jax.random.PRNGKey(0)
    B, N, NCLS = 2, 128, 8
    k1, k2, k3, k4, k5 = jax.random.split(key, 5)

    ori_points = jax.random.normal(k1, (B, N, 3), jnp.float32)
    points = ori_points + 0.01 * jax.random.normal(k2, (B, N, 3), jnp.float32)
    normal_vec = jax.random.normal(k3, (B, N, 3), jnp.float32)
    g_hat = jax.random.normal(k4, (B, N, 3), jnp.float32)
    logits = jax.random.normal(k5, (B, NCLS), jnp.float32)

    pred0 = int(jnp.argmax(logits[0]))                        # test-only host read
    target_adv = jnp.array([(pred0 + 1) % NCLS, 1], jnp.int32)  # adversarial branch
    target_in = jnp.array([pred0, 1], jnp.int32)                # gradient branch

    # 1) fused whole-array adversarial path and 2) gradient path, via the wrapper.
    for target in (target_adv, target_in):
        bp = BoundaryProjection2(step_size=0.05, stage2_steps=0.02,
                                 exponential_step=True)
        alpha_step0, grad_step0 = bp.learning_rate, bp.grad_lr
        out = bp.forward(points, ori_points, normal_vec, g_hat, logits, target)
        out = jax.block_until_ready(out)
        ref = _ref_forward(points, ori_points, g_hat, logits, target,
                           bp.weights[0], alpha_step0, grad_step0)
        assert out.shape == (B, N, 3)
        assert jnp.allclose(out, ref, rtol=1e-4, atol=1e-5), "mismatch vs reference"

    # 3) two-pass tiled adversarial path, forced small row tiles so the reduce pass
    #    really accumulates over multiple grid steps.
    N2 = 1024
    k6, k7, k8, k9 = jax.random.split(jax.random.PRNGKey(1), 4)
    ori2 = jax.random.normal(k6, (B, N2, 3), jnp.float32)
    pts2 = ori2 + 0.02 * jax.random.normal(k7, (B, N2, 3), jnp.float32)
    g2 = jax.random.normal(k8, (B, N2, 3), jnp.float32)
    logits2 = jax.random.normal(k9, (B, NCLS), jnp.float32)
    pred2 = int(jnp.argmax(logits2[0]))
    target2 = jnp.array([(pred2 + 1) % NCLS, 1], jnp.int32)
    params2 = jnp.array([0.03, 0.03, 0.5], jnp.float32)

    out2, is_adv2 = _bp2_forward(pts2, ori2, g2, logits2, target2, params2,
                                 row_tile_bytes=8192, force_tiled=True)
    out2 = jax.block_until_ready(out2)
    ref2 = _ref_forward(pts2, ori2, g2, logits2, target2, 0.5, 0.03, 0.03)
    assert out2.shape == (B, N2, 3)
    assert bool(is_adv2)
    assert jnp.allclose(out2, ref2, rtol=1e-4, atol=1e-5), "mismatch vs reference (tiled)"

    print("KERNEL_OK")
</pallas_src>

<mosaic_0001>
module attributes {stable_mosaic.version = 11 : i64} {
  func.func @_bp2_grad_kernel(%arg0: i32, %arg1: i32, %arg2: memref<1x1xf32, #tpu.memory_space<smem>>, %arg3: memref<1x3x128xf32, #tpu.memory_space<vmem>>, %arg4: memref<1x3x128xf32, #tpu.memory_space<vmem>>, %arg5: memref<1x3x128xf32, #tpu.memory_space<vmem>>) attributes {dimension_semantics = [#tpu.dimension_semantics<parallel>, #tpu.dimension_semantics<parallel>], iteration_bounds = array<i64: 2, 1>, scalar_prefetch = 0 : i64, scratch_operands = 0 : i64, tpu.core_type = #tpu.core_type<tc>, window_params = [{transform_indices = @transform_0, window_bounds = array<i64: 1, 1>}, {transform_indices = @transform_1, window_bounds = array<i64: 1, 3, 128>}, {transform_indices = @transform_2, window_bounds = array<i64: 1, 3, 128>}, {transform_indices = @transform_3, window_bounds = array<i64: 1, 3, 128>}]} {
    %c0 = arith.constant 0 : index
    %c0_0 = arith.constant 0 : index
    %c0_1 = arith.constant 0 : index
    %0 = vector.load %arg3[%c0, %c0_0, %c0_1] : memref<1x3x128xf32, #tpu.memory_space<vmem>>, vector<1x3x128xf32>
    %c0_2 = arith.constant 0 : index
    %c0_3 = arith.constant 0 : index
    %1 = memref.load %arg2[%c0_2, %c0_3] : memref<1x1xf32, #tpu.memory_space<smem>>
    %c0_4 = arith.constant 0 : index
    %c0_5 = arith.constant 0 : index
    %c0_6 = arith.constant 0 : index
    %2 = vector.load %arg4[%c0_4, %c0_5, %c0_6] : memref<1x3x128xf32, #tpu.memory_space<vmem>>, vector<1x3x128xf32>
    %3 = vector.broadcast %1 : f32 to vector<1x3x128xf32>
    %4 = arith.mulf %3, %2 : vector<1x3x128xf32>
    %5 = arith.subf %0, %4 : vector<1x3x128xf32>
    %c0_7 = arith.constant 0 : index
    %c0_8 = arith.constant 0 : index
    %c0_9 = arith.constant 0 : index
    %6 = vector.load %arg5[%c0_7, %c0_8, %c0_9] : memref<1x3x128xf32, #tpu.memory_space<vmem>>, vector<1x3x128xf32>
    tpu.vector_store %arg5[%c0_7, %c0_8, %c0_9], %5 {strides = array<i32>} : memref<1x3x128xf32, #tpu.memory_space<vmem>>, vector<1x3x128xf32>,
    return
  }
  func.func @transform_0(%arg0: i32, %arg1: i32) -> (i32, i32) {
    %c0_i32 = arith.constant 0 : i32
    %c0_i32_0 = arith.constant 0 : i32
    %c0_i32_1 = arith.constant 0 : i32
    return %c0_i32, %c0_i32_0 : i32, i32
  }
  func.func @transform_1(%arg0: i32, %arg1: i32) -> (i32, i32, i32) {
    %c0_i32 = arith.constant 0 : i32
    %c0_i32_0 = arith.constant 0 : i32
    return %arg0, %arg1, %c0_i32 : i32, i32, i32
  }
  func.func @transform_2(%arg0: i32, %arg1: i32) -> (i32, i32, i32) {
    %c0_i32 = arith.constant 0 : i32
    %c0_i32_0 = arith.constant 0 : i32
    return %arg0, %arg1, %c0_i32 : i32, i32, i32
  }
  func.func @transform_3(%arg0: i32, %arg1: i32) -> (i32, i32, i32) {
    %c0_i32 = arith.constant 0 : i32
    %c0_i32_0 = arith.constant 0 : i32
    return %arg0, %arg1, %c0_i32 : i32, i32, i32
  }
}

module attributes {stable_mosaic.version = 11 : i64} {
  func.func @_bp2_fused_adv_kernel(%arg0: memref<3xf32, #tpu.memory_space<smem>>, %arg1: memref<2x3x128xf32, #tpu.memory_space<vmem>>, %arg2: memref<2x3x128xf32, #tpu.memory_space<vmem>>, %arg3: memref<2x3x128xf32, #tpu.memory_space<vmem>>, %arg4: memref<2x3x128xf32, #tpu.memory_space<vmem>>) attributes {dimension_semantics = [], scalar_prefetch = 0 : i64, scratch_operands = 0 : i64, tpu.core_type = #tpu.core_type<tc>} {
    %c0 = arith.constant 0 : index
    %c0_0 = arith.constant 0 : index
    %c0_1 = arith.constant 0 : index
    %0 = vector.load %arg1[%c0, %c0_0, %c0_1] : memref<2x3x128xf32, #tpu.memory_space<vmem>>, vector<2x3x128xf32>
    %c0_2 = arith.constant 0 : index
    %c0_3 = arith.constant 0 : index
    %c0_4 = arith.constant 0 : index
    %1 = vector.load %arg2[%c0_2, %c0_3, %c0_4] : memref<2x3x128xf32, #tpu.memory_space<vmem>>, vector<2x3x128xf32>
    %c0_5 = arith.constant 0 : index
    %c0_6 = arith.constant 0 : index
    %c0_7 = arith.constant 0 : index
    %2 = vector.load %arg3[%c0_5, %c0_6, %c0_7] : memref<2x3x128xf32, #tpu.memory_space<vmem>>, vector<2x3x128xf32>
    %c0_8 = arith.constant 0 : index
    %3 = memref.load %arg0[%c0_8] : memref<3xf32, #tpu.memory_space<smem>>
    %c2 = arith.constant 2 : index
    %4 = memref.load %arg0[%c2] : memref<3xf32, #tpu.memory_space<smem>>
    %5 = arith.subf %0, %1 : vector<2x3x128xf32>
    %6 = arith.mulf %5, %5 : vector<2x3x128xf32>
    %cst = arith.constant dense<0.000000e+00> : vector<2x3xf32>
    %7 = vector.multi_reduction <add>, %6, %cst [2] : vector<2x3x128xf32> to vector<2x3xf32>
    %8 = vector.shape_cast %7 : vector<2x3xf32> to vector<2x3x1xf32>
    %cst_9 = arith.constant dense<0.000000e+00> : vector<2x1xf32>
    %9 = vector.multi_reduction <add>, %8, %cst_9 [1] : vector<2x3x1xf32> to vector<2x1xf32>
    %10 = vector.shape_cast %9 : vector<2x1xf32> to vector<2x1x1xf32>
    %11 = arith.mulf %5, %2 : vector<2x3x128xf32>
    %cst_10 = arith.constant dense<0.000000e+00> : vector<2x3xf32>
    %12 = vector.multi_reduction <add>, %11, %cst_10 [2] : vector<2x3x128xf32> to vector<2x3xf32>
    %13 = vector.shape_cast %12 : vector<2x3xf32> to vector<2x3x1xf32>
    %cst_11 = arith.constant dense<0.000000e+00> : vector<2x1xf32>
    %14 = vector.multi_reduction <add>, %13, %cst_11 [1] : vector<2x3x1xf32> to vector<2x1xf32>
    %15 = vector.shape_cast %14 : vector<2x1xf32> to vector<2x1x1xf32>
    %16 = arith.mulf %2, %2 : vector<2x3x128xf32>
    %cst_12 = arith.constant dense<0.000000e+00> : vector<2x3xf32>
    %17 = vector.multi_reduction <add>, %16, %cst_12 [2] : vector<2x3x128xf32> to vector<2x3xf32>
    %18 = vector.shape_cast %17 : vector<2x3xf32> to vector<2x3x1xf32>
    %cst_13 = arith.constant dense<0.000000e+00> : vector<2x1xf32>
    %19 = vector.multi_reduction <add>, %18, %cst_13 [1] : vector<2x3x1xf32> to vector<2x1xf32>
    %20 = vector.shape_cast %19 : vector<2x1xf32> to vector<2x1x1xf32>
    %21 = math.sqrt %10 : vector<2x1x1xf32>
    %22 = vector.broadcast %4 : f32 to vector<2x1x1xf32>
    %23 = arith.divf %22, %21 : vector<2x1x1xf32>
    %24 = arith.mulf %23, %15 : vector<2x1x1xf32>
    %25 = arith.divf %24, %20 : vector<2x1x1xf32>
    %26 = arith.mulf %4, %4 : f32
    %27 = arith.mulf %24, %24 : vector<2x1x1xf32>
    %28 = arith.divf %27, %20 : vector<2x1x1xf32>
    %29 = vector.broadcast %26 : f32 to vector<2x1x1xf32>
    %30 = arith.subf %29, %28 : vector<2x1x1xf32>
    %cst_14 = arith.constant dense<0.000000e+00> : vector<1x1xf32>
    %31 = vector.multi_reduction <add>, %30, %cst_14 [0] : vector<2x1x1xf32> to vector<1x1xf32>
    %32 = vector.shape_cast %31 : vector<1x1xf32> to vector<1x1x1xf32>
    %33 = math.sqrt %32 : vector<1x1x1xf32>
    %34 = vector.broadcast %3 : f32 to vector<1x1x1xf32>
    %35 = arith.divf %34, %33 : vector<1x1x1xf32>
    %36 = vector.broadcast %23 : vector<2x1x1xf32> to vector<2x3x128xf32>
    %37 = arith.mulf %36, %5 : vector<2x3x128xf32>
    %38 = vector.broadcast %25 : vector<2x1x1xf32> to vector<2x3x128xf32>
    %39 = arith.mulf %38, %2 : vector<2x3x128xf32>
    %40 = arith.subf %37, %39 : vector<2x3x128xf32>
    %41 = vector.broadcast %35 : vector<1x1x1xf32> to vector<2x3x128xf32>
    %42 = arith.mulf %41, %40 : vector<2x3x128xf32>
    %43 = arith.subf %0, %42 : vector<2x3x128xf32>
    %c0_15 = arith.constant 0 : index
    %c0_16 = arith.constant 0 : index
    %c0_17 = arith.constant 0 : index
    %44 = vector.load %arg4[%c0_15, %c0_16, %c0_17] : memref<2x3x128xf32, #tpu.memory_space<vmem>>, vector<2x3x128xf32>
    tpu.vector_store %arg4[%c0_15, %c0_16, %c0_17], %43 {strides = array<i32>} : memref<2x3x128xf32, #tpu.memory_space<vmem>>, vector<2x3x128xf32>,
    return
  }
}

</mosaic_0001>

<llo_original>
// kernel: branch_0_fun.1
$region0: #{branch_0_fun.1}
  #allocation0 [shape = 'u32[]', space=smem, size = 0x4, offset = 0x4, fixed_abs, tag = 'smem constant byte address 0x4 - core index']
  #allocation1 [shape = 'u32[144,128]{1,0:T(1,128)}', space=vmem, size = 0x12000, scoped, tag = 'internal scratch']
  #allocation2 [shape = 'f32[1,1]{1,0:T(1,128)S(6)}', space=smem, size = 0x200, scoped, tag = 'scoped memory for branch_0_fun.1']
  %s0 = inlined_call_operand.<no memory space> [shape: f32[1,1], index: 0, kind: input, shape index: {}]
  %s1 = inlined_call_operand.vmem [shape: f32[2,3,128], index: 1, kind: input, shape index: {}]
  %s2 = inlined_call_operand.vmem [shape: f32[2,3,128], index: 2, kind: input, shape index: {}]
  %s3 = inlined_call_operand.vmem [shape: f32[2,3,128], index: 3, kind: output, shape index: {}]
  %s4 = sld [smem:[#allocation0]]
  $region45: #{branch_0_fun.1} parent=0
    _
  %s6 = ssub.s32 1, %s4
  %s7 = scalar_select 0, %s6, %s4
  %8 = sst [smem:[#allocation2]] %s0
  loop: start=0, step=1, limit=4
  $region2: #{branch_0_fun.1} parent=0 // loop_pre_header
    _
  $region3: #{branch_0_fun.1} parent=0 // loop_header
    %s10 = sphi 0, %s14
    %p11 = scmp.ge.s32.totalorder %s10, 4
    %s17 = sphi 0, %s29
    %s18 = sphi 0, %s25
    %s19 = sphi 0, %s17
    %s20 = sphi 0, %s18
    %s21 = sphi 0, %s19
    %s22 = sphi 0, %s20
    %s30 = sphi 0, %s30
    %s32 = sphi 0, %s30
    %s33 = sphi 0, %s32
    %s47 = sphi 0, %s33
    %s55 = sphi 0, %s57
    %s58 = sphi 0, %s55
    %s59 = sphi 0, %s58
    %s75 = sphi 0, %s59
    %s83 = sphi 0, %s85
    %s86 = sphi 0, %s83
    %s87 = sphi 0, %s86
    %s103 = sphi 0, %s87
    %s111 = sphi 0, %s113
    %s114 = sphi 0, %s111
    %s115 = sphi 0, %s114
    %s131 = sphi 0, %s115
  $region4: #{branch_0_fun.1} parent=0 // loop_header_branch
    %13 = sbr.rel (%p11) target = $region8
  $region5: #{branch_0_fun.1} parent=0 // loop_body
    %s15 = ssub.s32 %s10, 1
    %s16 = ssub.s32 %s10, 2
    %s23 = sadd.s32 1, %s18
    %p24 = scmp.ge.s32.totalorder %s23, 1
    %s25 = scalar_select %p24, 0, %s23
    %s26 = sadd.s32 1, %s17
    %s27 = scalar_select %p24, %s26, %s17
    %p28 = scmp.ge.s32.totalorder %s27, 2
    %s29 = scalar_select %p28, 0, %s27
    %s31 = sadd.s32 %s30, 1
    %p34 = scmp.eq.s32.totalorder %s10, 1
    %p35 = scmp.ne.s32.totalorder %s30, %s32
    %p36 = scmp.eq.s32.totalorder %s10, 0
    %p37 = por %p35, %p36
    %p38 = scmp.ne.s32.totalorder %s30, %s32
    %p39 = scmp.eq.s32.totalorder %s15, 1
    %p40 = por %p38, %p39
    %p41 = scmp.ne.s32.totalorder %s32, %s33
    %p42 = scmp.eq.s32.totalorder %s15, 0
    %p43 = por %p41, %p42
    %p44 = scmp.ne.s32.totalorder %s32, %s33
    %p45 = scmp.eq.s32.totalorder %s16, 1
    %p46 = por %p44, %p45
    %p48 = scmp.ne.s32.totalorder %s33, %s47
    %p49 = scmp.eq.s32.totalorder %s16, 0
    %p50 = por %p48, %p49
    %s51 = ssub.s32 %s17, %s29
    %s52 = ssub.s32 %s18, %s25
    %s53 = sor.u32 %s51, %s52
    %p54 = scmp.eq.s32.totalorder %s53, 0
    %s56 = sadd.s32 %s55, 1
    %s57 = scalar_select %p54, %s55, %s56
    %p60 = pneg %p54
    %p61 = scmp.eq.s32.totalorder %s10, 1
    %p62 = por %p60, %p61
    %p63 = scmp.ne.s32.totalorder %s55, %s58
    %p64 = scmp.eq.s32.totalorder %s10, 0
    %p65 = por %p63, %p64
    %p66 = scmp.ne.s32.totalorder %s55, %s58
    %p67 = scmp.eq.s32.totalorder %s15, 1
    %p68 = por %p66, %p67
    %p69 = scmp.ne.s32.totalorder %s58, %s59
    %p70 = scmp.eq.s32.totalorder %s15, 0
    %p71 = por %p69, %p70
    %p72 = scmp.ne.s32.totalorder %s58, %s59
    %p73 = scmp.eq.s32.totalorder %s16, 1
    %p74 = por %p72, %p73
    %p76 = scmp.ne.s32.totalorder %s59, %s75
    %p77 = scmp.eq.s32.totalorder %s16, 0
    %p78 = por %p76, %p77
    %s79 = ssub.s32 %s17, %s29
    %s80 = ssub.s32 %s18, %s25
    %s81 = sor.u32 %s79, %s80
    %p82 = scmp.eq.s32.totalorder %s81, 0
    %s84 = sadd.s32 %s83, 1
    %s85 = scalar_select %p82, %s83, %s84
    %p88 = pneg %p82
    %p89 = scmp.eq.s32.totalorder %s10, 1
    %p90 = por %p88, %p89
    %p91 = scmp.ne.s32.totalorder %s83, %s86
    %p92 = scmp.eq.s32.totalorder %s10, 0
    %p93 = por %p91, %p92
    %p94 = scmp.ne.s32.totalorder %s83, %s86
    %p95 = scmp.eq.s32.totalorder %s15, 1
    %p96 = por %p94, %p95
    %p97 = scmp.ne.s32.totalorder %s86, %s87
    %p98 = scmp.eq.s32.totalorder %s15, 0
    %p99 = por %p97, %p98
    %p100 = scmp.ne.s32.totalorder %s86, %s87
    %p101 = scmp.eq.s32.totalorder %s16, 1
    %p102 = por %p100, %p101
    %p104 = scmp.ne.s32.totalorder %s87, %s103
    %p105 = scmp.eq.s32.totalorder %s16, 0
    %p106 = por %p104, %p105
    %s107 = ssub.s32 %s17, %s29
    %s108 = ssub.s32 %s18, %s25
    %s109 = sor.u32 %s107, %s108
    %p110 = scmp.eq.s32.totalorder %s109, 0
    %s112 = sadd.s32 %s111, 1
    %s113 = scalar_select %p110, %s111, %s112
    %p116 = pneg %p110
    %p117 = scmp.eq.s32.totalorder %s10, 1
    %p118 = por %p116, %p117
    %p119 = scmp.ne.s32.totalorder %s111, %s114
    %p120 = scmp.eq.s32.totalorder %s10, 0
    %p121 = por %p119, %p120
    %p122 = scmp.ne.s32.totalorder %s111, %s114
    %p123 = scmp.eq.s32.totalorder %s15, 1
    %p124 = por %p122, %p123
    %p125 = scmp.ne.s32.totalorder %s114, %s115
    %p126 = scmp.eq.s32.totalorder %s15, 0
    %p127 = por %p125, %p126
    %p128 = scmp.ne.s32.totalorder %s114, %s115
    %p129 = scmp.eq.s32.totalorder %s16, 1
    %p130 = por %p128, %p129
    %p132 = scmp.ne.s32.totalorder %s115, %s131
    %p133 = scmp.eq.s32.totalorder %s16, 0
    %p134 = por %p132, %p133
    %p135 = scmp.le.s32.totalorder 1, %s10
    %p136 = scmp.lt.s32.totalorder %s10, 3
    %p137 = pnand %p135, %p136
    %p138 = pneg %p137
    // Predicated region
    $region9: #{branch_0_fun.1} parent=5 // pred_check
      _
    $region10: #{branch_0_fun.1} parent=5 // pred_check_branch
      %140 = sbr.rel (%p137) target = $region12
    $region11: #{branch_0_fun.1} parent=5 // pred_region
      %s141 = ssub.s32 %s10, 1
      // Predicated region
      $region13: #{branch_0_fun.1} parent=11 // pred_check
        %p142 = pneg %p43
      $region14: #{branch_0_fun.1} parent=11 // pred_check_branch
        %144 = sbr.rel (%p142) target = $region16
      $region15: #{branch_0_fun.1} parent=11 // pred_region
        _
      $region16: #{branch_0_fun.1} parent=11 // pred_fallthru
        _
    $region12: #{branch_0_fun.1} parent=5 // pred_fallthru
      _
    %p145 = scmp.lt.s32.totalorder %s10, 2
    // Predicated region
    $region17: #{branch_0_fun.1} parent=5 // pred_check
      %p146 = pneg %p145
    $region18: #{branch_0_fun.1} parent=5 // pred_check_branch
      %148 = sbr.rel (%p146) target = $region20
    $region19: #{branch_0_fun.1} parent=5 // pred_region
      // Predicated region
      $region21: #{branch_0_fun.1} parent=19 // pred_check
        %p149 = pneg %p65
      $region22: #{branch_0_fun.1} parent=19 // pred_check_branch
        %151 = sbr.rel (%p149) target = $region24
      $region23: #{branch_0_fun.1} parent=19 // pred_region
        %p152 = scmp.lt.s32.totalorder %s17, 1
        %s153 = scalar_select %p152, %s17, 1
        %p154 = scmp.lt.s32.totalorder %s18, 0
        %s155 = scalar_select %p154, %s18, 0
        %s156 = sadd.s32 %s155, %s153
        %s157 = smul.addr %s156, 4
        %s158 = scalar_lea.vmem %s1, %s157
      $region24: #{branch_0_fun.1} parent=19 // pred_fallthru
        _
      // Predicated region
      $region25: #{branch_0_fun.1} parent=19 // pred_check
        %p159 = pneg %p93
      $region26: #{branch_0_fun.1} parent=19 // pred_check_branch
        %161 = sbr.rel (%p159) target = $region28
      $region27: #{branch_0_fun.1} parent=19 // pred_region
        %p162 = scmp.lt.s32.totalorder %s17, 1
        %s163 = scalar_select %p162, %s17, 1
        %p164 = scmp.lt.s32.totalorder %s18, 0
        %s165 = scalar_select %p164, %s18, 0
        %s166 = sadd.s32 %s165, %s163
        %s167 = smul.addr %s166, 4
        %s168 = scalar_lea.vmem %s2, %s167
      $region28: #{branch_0_fun.1} parent=19 // pred_fallthru
        _
    $region20: #{branch_0_fun.1} parent=5 // pred_fallthru
      _
    %p169 = scmp.le.s32.totalorder 1, %s10
    %p170 = scmp.lt.s32.totalorder %s10, 3
    %p171 = pnand %p169, %p170
    %p172 = pneg %p171
    // Predicated region
    $region29: #{branch_0_fun.1} parent=5 // pred_check
      _
    $region30: #{branch_0_fun.1} parent=5 // pred_check_branch
      %174 = sbr.rel (%p171) target = $region32
    $region31: #{branch_0_fun.1} parent=5 // pred_region
      %s175 = ssub.s32 %s10, 1
      %p176 = pneg %p43
      %p177 = pneg %p40
      %p178 = scmp.lt.s32.totalorder %s19, 1
      %s179 = scalar_select %p178, %s19, 1
      %p180 = scmp.lt.s32.totalorder %s20, 0
      %s181 = scalar_select %p180, %s20, 0
      %s182 = sadd.s32 %s181, %s179
      %s183 = smul.addr %s182, 4
      %s184 = scalar_lea.vmem %s1, %s183
      %p185 = pneg %p71
      %p186 = pneg %p68
      %p187 = scmp.lt.s32.totalorder %s19, 1
      %s188 = scalar_select %p187, %s19, 1
      %p189 = scmp.lt.s32.totalorder %s20, 0
      %s190 = scalar_select %p189, %s20, 0
      %s191 = sadd.s32 %s190, %s188
      %s192 = smul.addr %s191, 4
      %s193 = scalar_lea.vmem %s2, %s192
      %p194 = pneg %p99
      %p195 = pneg %p96
      %p196 = pneg %p127
      %p197 = pneg %p124
      %p198 = scmp.lt.s32.totalorder %s19, 1
      %s199 = scalar_select %p198, %s19, 1
      %p200 = scmp.lt.s32.totalorder %s20, 0
      %s201 = scalar_select %p200, %s20, 0
      %s202 = sadd.s32 %s201, %s199
      %s203 = smul.addr %s202, 4
      %s204 = scalar_lea.vmem %s3, %s203
      %p205 = scmp.lt.s32.totalorder %s19, 1
      %s206 = scalar_select %p205, %s19, 1
      %p207 = scmp.lt.s32.totalorder %s20, 0
      %s208 = scalar_select %p207, %s20, 0
      %s209 = sadd.s32 %s208, %s206
      %s210 = smul.addr %s209, 4
      %s211 = scalar_lea.vmem %s1, %s210
      %p212 = scmp.lt.s32.totalorder %s19, 1
      %s213 = scalar_select %p212, %s19, 1
      %p214 = scmp.lt.s32.totalorder %s20, 0
      %s215 = scalar_select %p214, %s20, 0
      %s216 = sadd.s32 %s215, %s213
      %s217 = smul.addr %s216, 4
      %s218 = scalar_lea.vmem %s2, %s217
      %p219 = scmp.lt.s32.totalorder %s19, 1
      %s220 = scalar_select %p219, %s19, 1
      %p221 = scmp.lt.s32.totalorder %s20, 0
      %s222 = scalar_select %p221, %s20, 0
      %s223 = sadd.s32 %s222, %s220
      %s224 = smul.addr %s223, 4
      %s225 = scalar_lea.vmem %s3, %s224
      %v226 = vld [vmem:[%s211] sm:$0x7]
      %s227 = sld [smem:[#allocation2]]
      %v228 = vld [vmem:[%s218] sm:$0x7]
      %v229 = vstv %s227
      %v230 = vmul.f32 %v229, %v228
      %v231 = vsub.f32 %v226, %v230
      %232 = vst [vmem:[%s225] sm:$0x7] %v231
      %p233 = scmp.lt.s32.totalorder %s19, 1
      %s234 = scalar_select %p233, %s19, 1
      %p235 = scmp.lt.s32.totalorder %s20, 0
      %s236 = scalar_select %p235, %s20, 0
      %s237 = sadd.s32 %s236, %s234
      %s238 = smul.addr %s237, 4
      %s239 = scalar_lea.vmem %s3, %s238
      // Predicated region
      $region33: #{branch_0_fun.1} parent=31 // pred_check
        %p240 = pneg %p124
      $region34: #{branch_0_fun.1} parent=31 // pred_check_branch
        %242 = sbr.rel (%p240) target = $region36
      $region35: #{branch_0_fun.1} parent=31 // pred_region
        _
      $region36: #{branch_0_fun.1} parent=31 // pred_fallthru
        _
    $region32: #{branch_0_fun.1} parent=5 // pred_fallthru
      _
    %p243 = scmp.le.s32.totalorder 2, %s10
    // Predicated region
    $region37: #{branch_0_fun.1} parent=5 // pred_check
      %p244 = pneg %p243
    $region38: #{branch_0_fun.1} parent=5 // pred_check_branch
      %246 = sbr.rel (%p244) target = $region40
    $region39: #{branch_0_fun.1} parent=5 // pred_region
      %s247 = ssub.s32 %s10, 2
      // Predicated region
      $region41: #{branch_0_fun.1} parent=39 // pred_check
        %p248 = pneg %p130
      $region42: #{branch_0_fun.1} parent=39 // pred_check_branch
        %250 = sbr.rel (%p248) target = $region44
      $region43: #{branch_0_fun.1} parent=39 // pred_region
        %p251 = scmp.lt.s32.totalorder %s21, 1
        %s252 = scalar_select %p251, %s21, 1
        %p253 = scmp.lt.s32.totalorder %s22, 0
        %s254 = scalar_select %p253, %s22, 0
        %s255 = sadd.s32 %s254, %s252
        %s256 = smul.addr %s255, 4
        %s257 = scalar_lea.vmem %s3, %s256
      $region44: #{branch_0_fun.1} parent=39 // pred_fallthru
        _
    $region40: #{branch_0_fun.1} parent=5 // pred_fallthru
      _
  $region6: #{branch_0_fun.1} parent=0 // loop_footer
    %s14 = sadd.s32 1, %s10
  $region7: #{branch_0_fun.1} parent=0 // loop_footer_branch
    %9 = sbr.rel target = $region3
  $region8: #{branch_0_fun.1} parent=0 // loop_exit
    _

// kernel: branch_1_fun.1
$region0: #{branch_1_fun.1}
  #allocation0 [shape = 'u32[]', space=smem, size = 0x4, offset = 0x4, fixed_abs, tag = 'smem constant byte address 0x4 - core index']
  #allocation1 [shape = 'u32[144,128]{1,0:T(1,128)}', space=vmem, size = 0x12000, scoped, tag = 'internal scratch']
  %s0 = inlined_call_operand.vmem [shape: f32[3], index: 0, kind: input, shape index: {}]
  %s1 = inlined_call_operand.vmem [shape: f32[2,3,128], index: 1, kind: input, shape index: {}]
  %s2 = inlined_call_operand.vmem [shape: f32[2,3,128], index: 2, kind: input, shape index: {}]
  %s3 = inlined_call_operand.vmem [shape: f32[2,3,128], index: 3, kind: input, shape index: {}]
  %s4 = inlined_call_operand.vmem [shape: f32[2,3,128], index: 4, kind: output, shape index: {}]
  %s5 = sld [smem:[#allocation0]]
  $region30: #{branch_1_fun.1} parent=0
    _
  %s7 = ssub.s32 1, %s5
  %s8 = scalar_select 0, %s7, %s5
  $region1: #{branch_1_fun.1} parent=0
    #allocation2 [shape = 'u8[512]{0}', space=smem, size = 0x200, scoped, tag = 'input window, operand 0, single buffered']
    #allocation3 [shape = 's32[1]{0}', space=sflag, size = 0x4, scoped, tag = 'scoped memory for branch_1_fun.1']
    %9 = vsyncpa [#allocation3], 0
    // Predicated region
    $region2: #{branch_1_fun.1} parent=1 // pred_check
      _
    $region3: #{branch_1_fun.1} parent=1 // pred_check_branch
      %11 = sbr.rel (0) target = $region5
    $region4: #{branch_1_fun.1} parent=1 // pred_region
      %s13 = ssub.s32 16, 16
      %14 = vsyncadd [#allocation3], %s13
      %s16 = sshll.u32 %s0, 4
      %s17 = int_to_ptr.vmem [resolvable:$true] %s16
      %19 = dma.vmem_to_smem %s17, 16, [#allocation2], [#allocation3]
    $region5: #{branch_1_fun.1} parent=1 // pred_fallthru
      _
    // Predicated region
    $region6: #{branch_1_fun.1} parent=1 // pred_check
      _
    $region7: #{branch_1_fun.1} parent=1 // pred_check_branch
      %21 = sbr.rel (0) target = $region9
    $region8: #{branch_1_fun.1} parent=1 // pred_region
      _
    $region9: #{branch_1_fun.1} parent=1 // pred_fallthru
      _
    // Predicated region
    $region10: #{branch_1_fun.1} parent=1 // pred_check
      _
    $region11: #{branch_1_fun.1} parent=1 // pred_check_branch
      %23 = sbr.rel (0) target = $region13
    $region12: #{branch_1_fun.1} parent=1 // pred_region
      _
    $region13: #{branch_1_fun.1} parent=1 // pred_fallthru
      _
    // Predicated region
    $region14: #{branch_1_fun.1} parent=1 // pred_check
      _
    $region15: #{branch_1_fun.1} parent=1 // pred_check_branch
      %25 = sbr.rel (0) target = $region17
    $region16: #{branch_1_fun.1} parent=1 // pred_region
      _
    $region17: #{branch_1_fun.1} parent=1 // pred_fallthru
      _
    // Predicated region
    $region18: #{branch_1_fun.1} parent=1 // pred_check
      _
    $region19: #{branch_1_fun.1} parent=1 // pred_check_branch
      %27 = sbr.rel (0) target = $region21
    $region20: #{branch_1_fun.1} parent=1 // pred_region
      %28 = dma.done [#allocation3], 16
    $region21: #{branch_1_fun.1} parent=1 // pred_fallthru
      _
    %29 = sfence
    %v30 = vld [vmem:[%s1] sm:$0x7]
    %v31 = vld [vmem:[%s1 + $0x4] sm:$0x7]
    %v32 = vld [vmem:[%s2] sm:$0x7]
    %v33 = vld [vmem:[%s2 + $0x4] sm:$0x7]
    %v34 = vld [vmem:[%s3] sm:$0x7]
    %v35 = vld [vmem:[%s3 + $0x4] sm:$0x7]
    %s36 = sld [smem:[#allocation2]]
    %s37 = sld [smem:[#allocation2 + $0x2]]
    %v38 = vsub.f32 %v30, %v32
    %v39 = vsub.f32 %v31, %v33
    %v40 = vmul.f32 %v38, %v38
    %v41 = vmul.f32 %v39, %v39
    %vm42 = vcmask 1042432
    %v43 = vsel %vm42, %v40, 0.0
    %44 = vadd.xlane.f32.xlu0 %v43
    %v45 = vpop.xlane.xlu0 %44
    %v46 = vsel %vm42, %v41, 0.0
    %47 = vadd.xlane.f32.xlu0 %v46
    %v48 = vpop.xlane.xlu0 %47
    %v49 = vsel %vm42, %v45, 0.0
    %v50 = vrot.slane %v49, 4
    %v51 = vadd.f32 %v49, %v50
    %v52 = vrot.slane %v51, 2
    %v53 = vadd.f32 %v51, %v52
    %v54 = vrot.slane %v53, 1
    %v55 = vadd.f32 %v53, %v54
    %v56 = vsel %vm42, %v48, 0.0
    %v57 = vrot.slane %v56, 4
    %v58 = vadd.f32 %v56, %v57
    %v59 = vrot.slane %v58, 2
    %v60 = vadd.f32 %v58, %v59
    %v61 = vrot.slane %v60, 1
    %v62 = vadd.f32 %v60, %v61
    %v63 = vmul.f32 %v38, %v34
    %v64 = vmul.f32 %v39, %v35
    %v65 = vsel %vm42, %v63, 0.0
    %66 = vadd.xlane.f32.xlu0 %v65
    %v67 = vpop.xlane.xlu0 %66
    %v68 = vsel %vm42, %v64, 0.0
    %69 = vadd.xlane.f32.xlu0 %v68
    %v70 = vpop.xlane.xlu0 %69
    %v71 = vsel %vm42, %v67, 0.0
    %v72 = vrot.slane %v71, 4
    %v73 = vadd.f32 %v71, %v72
    %v74 = vrot.slane %v73, 2
    %v75 = vadd.f32 %v73, %v74
    %v76 = vrot.slane %v75, 1
    %v77 = vadd.f32 %v75, %v76
    %v78 = vsel %vm42, %v70, 0.0
    %v79 = vrot.slane %v78, 4
    %v80 = vadd.f32 %v78, %v79
    %v81 = vrot.slane %v80, 2
    %v82 = vadd.f32 %v80, %v81
    %v83 = vrot.slane %v82, 1
    %v84 = vadd.f32 %v82, %v83
    %v85 = vmul.f32 %v34, %v34
    %v86 = vmul.f32 %v35, %v35
    %v87 = vsel %vm42, %v85, 0.0
    %88 = vadd.xlane.f32.xlu0 %v87
    %v89 = vpop.xlane.xlu0 %88
    %v90 = vsel %vm42, %v86, 0.0
    %91 = vadd.xlane.f32.xlu0 %v90
    %v92 = vpop.xlane.xlu0 %91
    %v93 = vsel %vm42, %v89, 0.0
    %v94 = vrot.slane %v93, 4
    %v95 = vadd.f32 %v93, %v94
    %v96 = vrot.slane %v95, 2
    %v97 = vadd.f32 %v95, %v96
    %v98 = vrot.slane %v97, 1
    %v99 = vadd.f32 %v97, %v98
    %v100 = vsel %vm42, %v92, 0.0
    %v101 = vrot.slane %v100, 4
    %v102 = vadd.f32 %v100, %v101
    %v103 = vrot.slane %v102, 2
    %v104 = vadd.f32 %v102, %v103
    %v105 = vrot.slane %v104, 1
    %v106 = vadd.f32 %v104, %v105
    %v107 = vrsqrt.pop %v55
    %v108 = vmul.f32 %v55, %v107
    %vm109 = vcmp.eq.f32.partialorder %v55, inf
    %v110 = vsel %vm109, %v55, %v108
    %vm111 = vcmp.eq.f32.partialorder %v55, 0.0
    %v112 = vand.u32 %v55, 2147483648
    %v113 = vsel %vm111, %v112, %v110
    %v114 = vrsqrt.pop %v62
    %v115 = vmul.f32 %v62, %v114
    %vm116 = vcmp.eq.f32.partialorder %v62, inf
    %v117 = vsel %vm116, %v62, %v115
    %vm118 = vcmp.eq.f32.partialorder %v62, 0.0
    %v119 = vand.u32 %v62, 2147483648
    %v120 = vsel %vm118, %v119, %v117
    %v121 = vstv %s37
    %v122 = vrcp.pop %v113
    %v123 = vmul.f32 %v121, %v122
    %v124 = vrcp.pop %v120
    %v125 = vmul.f32 %v121, %v124
    %v126 = vmul.f32 %v123, %v77
    %v127 = vmul.f32 %v125, %v84
    %v128 = vrcp.pop %v99
    %v129 = vmul.f32 %v126, %v128
    %v130 = vrcp.pop %v106
    %v131 = vmul.f32 %v127, %v130
    %s132 = smul.f32 %s37, %s37
    %v133 = vmul.f32 %v126, %v126
    %v134 = vmul.f32 %v127, %v127
    %v135 = vmul.f32 %v133, %v128
    %v136 = vmul.f32 %v134, %v130
    %v137 = vstv %s132
    %v138 = vsub.f32 %v137, %v135
    %v139 = vsub.f32 %v137, %v136
    %v140 = vadd.f32 %v138, %v139
    %v141 = vrsqrt.pop %v140
    %v142 = vmul.f32 %v140, %v141
    %vm143 = vcmp.eq.f32.partialorder %v140, inf
    %v144 = vsel %vm143, %v140, %v142
    %vm145 = vcmp.eq.f32.partialorder %v140, 0.0
    %v146 = vand.u32 %v140, 2147483648
    %v147 = vsel %vm145, %v146, %v144
    %v148 = vstv %s36
    %v149 = vrcp.pop %v147
    %v150 = vmul.f32 %v148, %v149
    %v151 = vmul.f32 %v123, %v38
    %v152 = vmul.f32 %v125, %v39
    %v153 = vmul.f32 %v129, %v34
    %v154 = vmul.f32 %v131, %v35
    %v155 = vsub.f32 %v151, %v153
    %v156 = vsub.f32 %v152, %v154
    %v157 = vmul.f32 %v150, %v155
    %v158 = vmul.f32 %v150, %v156
    %v159 = vsub.f32 %v30, %v157
    %v160 = vsub.f32 %v31, %v158
    %161 = vst [vmem:[%s4] sm:$0x7] %v159
    %162 = vst [vmem:[%s4 + $0x4] sm:$0x7] %v160
    // Predicated region
    $region22: #{branch_1_fun.1} parent=1 // pred_check
      _
    $region23: #{branch_1_fun.1} parent=1 // pred_check_branch
      %164 = sbr.rel (0) target = $region25
    $region24: #{branch_1_fun.1} parent=1 // pred_region
      _
    $region25: #{branch_1_fun.1} parent=1 // pred_fallthru
      _
    // Predicated region
    $region26: #{branch_1_fun.1} parent=1 // pred_check
      _
    $region27: #{branch_1_fun.1} parent=1 // pred_check_branch
      %166 = sbr.rel (0) target = $region29
    $region28: #{branch_1_fun.1} parent=1 // pred_region
      _
    $region29: #{branch_1_fun.1} parent=1 // pred_fallthru
      _
    %167 = vsyncpa [#allocation3], 1

</llo_original>
